<compile_context>
chip_gen: v5e
topology: v5e:2x2
jax: 0.10.0
libtpu: 0.0.40
codegen_flags: <defaults>
</compile_context>

<pallas_src>
import jax
import jax.numpy as jnp
from jax.experimental import pallas as pl
from jax.experimental.pallas import tpu as pltpu


def _round_up(v, m):
    return (v + m - 1) // m * m


def _vmem_bytes(shape, dtype):
    """VMEM footprint of an array, accounting for (sublane, 128) tile padding."""
    it = jnp.dtype(dtype).itemsize
    s = (1,) * max(0, 2 - len(shape)) + tuple(shape)
    sublane = 8 * (4 // it)          # 8 rows per tile for f32, 16 for bf16
    rows = _round_up(s[-2], sublane)
    cols = _round_up(s[-1], 128)
    lead = 1
    for d in s[:-2]:
        lead *= d
    return lead * rows * cols * it


def rnn_block_kernel(x_ref, wih_ref, whh_ref, bsum_ref, wfc_ref, bfc_ref,
                     out_ref, h_carry, slab):
    t_blk, b_blk, in_dim = x_ref.shape
    out_dim = out_ref.shape[-1]
    tb = pl.program_id(1)  # time-block index (serial "arbitrary" axis)

    # h_0 = 0 at the start of every sequence. The time index restarts at 0 for
    # every batch block, so this also re-initializes per batch block.
    @pl.when(tb == 0)
    def _():
        h_carry[...] = jnp.zeros_like(h_carry)

    slab_dtype = slab.dtype

    # (1) Hoisted input projection + pre-summed bias for all T_BLK timesteps:
    #     one MXU matmul with M = T_BLK*B rows instead of T_BLK tiny ones.
    #     NOTE: padded batch rows pick up tanh(bias + ...) garbage from here
    #     on; they are sliced away by the wrapper and never feed real rows.
    x2d = x_ref[...].reshape(t_blk * b_blk, in_dim)
    slab[...] = (
        jnp.dot(x2d, wih_ref[...], preferred_element_type=jnp.float32)
        + bsum_ref[...]).astype(slab_dtype)

    whh = whh_ref[...]

    # (2) Serial recurrence: only h_prev @ W_hh^T and the f32 tanh (EUP slot)
    #     remain on the per-timestep critical path.  h_new overwrites the
    #     pre-activation rows it just consumed (slab aliasing), and the carry
    #     stays in slab_dtype so no per-step cast is needed before the dot.
    def step(t, h):
        row = pl.multiple_of(t * b_blk, b_blk)
        pre_t = slab[pl.ds(row, b_blk), :]
        h_new = jnp.tanh(
            pre_t.astype(jnp.float32)
            + jnp.dot(h, whh, preferred_element_type=jnp.float32)
        ).astype(slab_dtype)
        slab[pl.ds(row, b_blk), :] = h_new
        return h_new

    h_final = jax.lax.fori_loop(0, t_blk, step, h_carry[...],
                                unroll=min(t_blk, 8))
    h_carry[...] = h_final

    # (3) Hoisted FC over the whole hidden-state slab + one slab writeback per
    #     grid step (natural last dim: tiny out_dim means no 16x write
    #     amplification in HBM).
    y2d = (jnp.dot(slab[...], wfc_ref[...], preferred_element_type=jnp.float32)
           + bfc_ref[...])
    out_ref[...] = y2d.reshape(t_blk, b_blk, out_dim).astype(out_ref.dtype)


def rnn_model_forward(x, params, *, t_blk=16, b_blk=None,
                      matmul_dtype=jnp.float32):
    """x: (seq_len, batch, input_dim) -> (seq_len, batch, output_dim).

    matmul_dtype=jnp.bfloat16 halves resident weight / slab / x-stream VMEM+HBM
    traffic and improves MXU throughput on v6e/v7x; accumulation and tanh stay
    float32.  b_blk defaults to min(batch_p, 128); on v6e/v7x a cap of 256
    matches the wider MXU, and on v7x choose b_blk <= batch_p/2 for batch_p>=16
    so the "parallel" batch axis has extent >= 2 and both TensorCores are used.
    """
    seq_len, batch, input_dim = x.shape
    w_ih = jnp.asarray(params["w_ih"], jnp.float32)
    w_hh = jnp.asarray(params["w_hh"], jnp.float32)
    b_ih = jnp.asarray(params["b_ih"], jnp.float32)
    b_hh = jnp.asarray(params["b_hh"], jnp.float32)
    w_fc = jnp.asarray(params["w_fc"], jnp.float32)
    b_fc = jnp.asarray(params["b_fc"], jnp.float32)
    hidden_dim = w_ih.shape[0]
    output_dim = w_fc.shape[0]

    use_bf16 = jnp.dtype(matmul_dtype) == jnp.dtype(jnp.bfloat16)
    x_dtype = jnp.bfloat16 if use_bf16 else jnp.float32
    slab_dtype = matmul_dtype

    # Pad: batch -> sublane multiple (8 for f32 x-blocks, 16 for bf16),
    # seq -> multiple of t_blk, hidden -> 128 lanes.  input_dim / output_dim
    # are kept at their natural sizes (full-dim last axis in the BlockSpecs)
    # to avoid 8x/16x HBM amplification on tiny feature dims.
    sub = 16 if use_bf16 else 8
    batch_p = _round_up(batch, sub)
    if b_blk is None:
        b_blk = min(batch_p, 128)
    b_blk = _round_up(b_blk, sub)
    batch_p = _round_up(batch_p, b_blk)
    seq_p = _round_up(seq_len, t_blk)
    hid_p = _round_up(hidden_dim, 128)

    x_p = jnp.zeros((seq_p, batch_p, input_dim), x_dtype)
    x_p = x_p.at[:seq_len, :batch, :].set(x.astype(x_dtype))

    wih_t = jnp.zeros((input_dim, hid_p), matmul_dtype)
    wih_t = wih_t.at[:, :hidden_dim].set(w_ih.T.astype(matmul_dtype))
    whh_t = jnp.zeros((hid_p, hid_p), matmul_dtype)
    whh_t = whh_t.at[:hidden_dim, :hidden_dim].set(w_hh.T.astype(matmul_dtype))
    wfc_t = jnp.zeros((hid_p, output_dim), matmul_dtype)
    wfc_t = wfc_t.at[:hidden_dim, :].set(w_fc.T.astype(matmul_dtype))
    bsum = jnp.zeros((1, hid_p), jnp.float32)
    bsum = bsum.at[0, :hidden_dim].set(b_ih + b_hh)     # pre-summed RNN bias
    bfc_r = b_fc.reshape(1, output_dim).astype(jnp.float32)

    n_b_blocks = batch_p // b_blk
    n_t_blocks = seq_p // t_blk

    # Explicit VMEM budget: resident weights + double-buffered x/out blocks +
    # slab + carry, with 1.5x headroom (v5e's scoped default is only 16 MiB).
    weights_b = (_vmem_bytes((input_dim, hid_p), matmul_dtype)
                 + _vmem_bytes((hid_p, hid_p), matmul_dtype)
                 + _vmem_bytes((hid_p, output_dim), matmul_dtype)
                 + _vmem_bytes((1, hid_p), jnp.float32)
                 + _vmem_bytes((1, output_dim), jnp.float32))
    io_b = (2 * _vmem_bytes((t_blk, b_blk, input_dim), x_dtype)
            + 2 * _vmem_bytes((t_blk, b_blk, output_dim), jnp.float32))
    scratch_b = (_vmem_bytes((t_blk * b_blk, hid_p), slab_dtype)
                 + _vmem_bytes((b_blk, hid_p), slab_dtype))
    vmem_limit = int(1.5 * (weights_b + io_b + scratch_b)) + (2 << 20)
    vmem_limit = min(max(vmem_limit, 8 << 20), 64 << 20)  # stay legal on v7x

    # Whole-array VMEM residency for the constants: no per-step DMA and no
    # double-buffering (halves their VMEM footprint vs tiled full-shape specs).
    resident = pl.BlockSpec(memory_space=pltpu.MemorySpace.VMEM)

    y_p = pl.pallas_call(
        rnn_block_kernel,
        out_shape=jax.ShapeDtypeStruct((seq_p, batch_p, output_dim),
                                       jnp.float32),
        grid_spec=pltpu.PrefetchScalarGridSpec(
            num_scalar_prefetch=0,
            grid=(n_b_blocks, n_t_blocks),
            in_specs=[
                pl.BlockSpec((t_blk, b_blk, input_dim),
                             lambda bb, tb: (tb, bb, 0)),
                resident,   # W_ih^T  (input_dim, hid_p)
                resident,   # W_hh^T  (hid_p,     hid_p)
                resident,   # b_ih + b_hh (1, hid_p)
                resident,   # W_fc^T  (hid_p, output_dim)
                resident,   # b_fc    (1, output_dim)
            ],
            out_specs=pl.BlockSpec((t_blk, b_blk, output_dim),
                                   lambda bb, tb: (tb, bb, 0)),
            scratch_shapes=[
                pltpu.VMEM((b_blk, hid_p), slab_dtype),          # h carry
                pltpu.VMEM((t_blk * b_blk, hid_p), slab_dtype),  # pre/h slab
            ],
        ),
        compiler_params=pltpu.CompilerParams(
            # Batch blocks are independent -> "parallel" (uses both TCs on
            # v7x when n_b_blocks >= 2); the time axis carries the recurrence
            # -> "arbitrary".
            dimension_semantics=("parallel", "arbitrary"),
            vmem_limit_bytes=vmem_limit),
    )(x_p, wih_t, whh_t, bsum, wfc_t, bfc_r)

    return y_p[:seq_len, :batch, :]


def rnn_model_reference(x, params):
    """Pure-JAX reference matching torch.nn.RNN(tanh) + Linear."""
    w_ih, w_hh, b_ih, b_hh, w_fc, b_fc = (
        params["w_ih"], params["w_hh"], params["b_ih"],
        params["b_hh"], params["w_fc"], params["b_fc"])
    batch = x.shape[1]
    h0 = jnp.zeros((batch, w_ih.shape[0]), jnp.float32)

    def step(h, x_t):
        h_new = jnp.tanh(x_t @ w_ih.T + b_ih + h @ w_hh.T + b_hh)
        return h_new, h_new

    _, hs = jax.lax.scan(step, h0, x)
    return hs @ w_fc.T + b_fc


def init_params(key, input_dim, hidden_dim, output_dim):
    ks = jax.random.split(key, 6)
    k_rnn = 1.0 / jnp.sqrt(hidden_dim)
    k_fc = 1.0 / jnp.sqrt(hidden_dim)
    u = lambda k, shape, bound: jax.random.uniform(
        k, shape, jnp.float32, minval=-bound, maxval=bound)
    return {
        "w_ih": u(ks[0], (hidden_dim, input_dim), k_rnn),
        "w_hh": u(ks[1], (hidden_dim, hidden_dim), k_rnn),
        "b_ih": u(ks[2], (hidden_dim,), k_rnn),
        "b_hh": u(ks[3], (hidden_dim,), k_rnn),
        "w_fc": u(ks[4], (output_dim, hidden_dim), k_fc),
        "b_fc": u(ks[5], (output_dim,), k_fc),
    }


if __name__ == "__main__":
    seq_len, batch, input_dim, hidden_dim, output_dim = 8, 2, 16, 32, 8

    key = jax.random.PRNGKey(0)
    k_x, k_p = jax.random.split(key)
    x = jax.random.normal(k_x, (seq_len, batch, input_dim), jnp.float32)
    params = init_params(k_p, input_dim, hidden_dim, output_dim)

    ref = jax.block_until_ready(rnn_model_reference(x, params))

    # f32 run with t_blk=4 so the hidden-state carry across time blocks and
    # the multi-time-block grid path are actually exercised (grid = (1, 2)).
    out = jax.block_until_ready(rnn_model_forward(x, params, t_blk=4))
    assert out.shape == (seq_len, batch, output_dim)
    assert jnp.allclose(out, ref, atol=1e-4, rtol=1e-4), float(
        jnp.max(jnp.abs(out - ref)))

    # Default-config f32 run (t_blk=16 pads the seq axis; exercises padding).
    out_d = jax.block_until_ready(rnn_model_forward(x, params))
    assert jnp.allclose(out_d, ref, atol=1e-4, rtol=1e-4), float(
        jnp.max(jnp.abs(out_d - ref)))

    # bf16-matmul / bf16-slab variant (the v6e/v7x-recommended configuration;
    # also exercises the 16-sublane batch padding and bf16 x stream).
    out_bf16 = jax.block_until_ready(
        rnn_model_forward(x, params, t_blk=4, matmul_dtype=jnp.bfloat16))
    assert float(jnp.max(jnp.abs(out_bf16 - ref))) < 0.1

    print("KERNEL_OK")
</pallas_src>

<mosaic_0001>
module attributes {stable_mosaic.version = 11 : i64} {
  func.func @rnn_block_kernel(%arg0: i32, %arg1: i32, %arg2: memref<4x8x16xf32, #tpu.memory_space<vmem>>, %arg3: memref<16x128xf32, #tpu.memory_space<vmem>>, %arg4: memref<128x128xf32, #tpu.memory_space<vmem>>, %arg5: memref<1x128xf32, #tpu.memory_space<vmem>>, %arg6: memref<128x8xf32, #tpu.memory_space<vmem>>, %arg7: memref<1x8xf32, #tpu.memory_space<vmem>>, %arg8: memref<4x8x8xf32, #tpu.memory_space<vmem>>, %arg9: memref<8x128xf32, #tpu.memory_space<vmem>>, %arg10: memref<32x128xf32, #tpu.memory_space<vmem>>) attributes {dimension_semantics = [#tpu.dimension_semantics<parallel>, #tpu.dimension_semantics<arbitrary>], iteration_bounds = array<i64: 1, 2>, scalar_prefetch = 0 : i64, scratch_operands = 2 : i64, tpu.core_type = #tpu.core_type<tc>, window_params = [{transform_indices = @transform_0, window_bounds = array<i64: 4, 8, 16>}, {pipeline_mode = #tpu.pipeline_mode<synchronous>, transform_indices = @transform_1, window_bounds = array<i64: 16, 128>}, {pipeline_mode = #tpu.pipeline_mode<synchronous>, transform_indices = @transform_2, window_bounds = array<i64: 128, 128>}, {pipeline_mode = #tpu.pipeline_mode<synchronous>, transform_indices = @transform_3, window_bounds = array<i64: 1, 128>}, {pipeline_mode = #tpu.pipeline_mode<synchronous>, transform_indices = @transform_4, window_bounds = array<i64: 128, 8>}, {pipeline_mode = #tpu.pipeline_mode<synchronous>, transform_indices = @transform_5, window_bounds = array<i64: 1, 8>}, {transform_indices = @transform_6, window_bounds = array<i64: 4, 8, 8>}]} {
    %c0_i32 = arith.constant 0 : i32
    %0 = arith.cmpi eq, %arg1, %c0_i32 : i32
    %1 = arith.extui %0 : i1 to i32
    %c0_i32_0 = arith.constant 0 : i32
    %2 = arith.cmpi ne, %1, %c0_i32_0 : i32
    scf.if %2 {
      %cst_41 = arith.constant 0.000000e+00 : f32
      %58 = vector.broadcast %cst_41 : f32 to vector<8x128xf32>
      %c0_42 = arith.constant 0 : index
      %c0_43 = arith.constant 0 : index
      %59 = vector.load %arg9[%c0_42, %c0_43] : memref<8x128xf32, #tpu.memory_space<vmem>>, vector<8x128xf32>
      tpu.vector_store %arg9[%c0_42, %c0_43], %58 {strides = array<i32>} : memref<8x128xf32, #tpu.memory_space<vmem>>, vector<8x128xf32>,
    } else {
    }
    %c0 = arith.constant 0 : index
    %c0_1 = arith.constant 0 : index
    %c0_2 = arith.constant 0 : index
    %3 = vector.load %arg2[%c0, %c0_1, %c0_2] : memref<4x8x16xf32, #tpu.memory_space<vmem>>, vector<4x8x16xf32>
    %4 = vector.shape_cast %3 : vector<4x8x16xf32> to vector<32x16xf32>
    %c0_3 = arith.constant 0 : index
    %c0_4 = arith.constant 0 : index
    %5 = vector.load %arg3[%c0_3, %c0_4] : memref<16x128xf32, #tpu.memory_space<vmem>>, vector<16x128xf32>
    %cst = arith.constant dense<0.000000e+00> : vector<32x128xf32>
    %6 = tpu.matmul %4, %5, %cst {dimension_numbers = #tpu.dot_dimension_numbers<[1], [0], [0], [1], [0, 0, 1, 1], [], []>} : vector<32x16xf32>, vector<16x128xf32>, vector<32x128xf32> -> vector<32x128xf32>
    %c0_5 = arith.constant 0 : index
    %c0_6 = arith.constant 0 : index
    %7 = vector.load %arg5[%c0_5, %c0_6] : memref<1x128xf32, #tpu.memory_space<vmem>>, vector<1x128xf32>
    %8 = vector.broadcast %7 : vector<1x128xf32> to vector<32x128xf32>
    %9 = arith.addf %6, %8 : vector<32x128xf32>
    %c0_7 = arith.constant 0 : index
    %c0_8 = arith.constant 0 : index
    %10 = vector.load %arg10[%c0_7, %c0_8] : memref<32x128xf32, #tpu.memory_space<vmem>>, vector<32x128xf32>
    tpu.vector_store %arg10[%c0_7, %c0_8], %9 {strides = array<i32>} : memref<32x128xf32, #tpu.memory_space<vmem>>, vector<32x128xf32>,
    %c0_9 = arith.constant 0 : index
    %c0_10 = arith.constant 0 : index
    %11 = vector.load %arg4[%c0_9, %c0_10] : memref<128x128xf32, #tpu.memory_space<vmem>>, vector<128x128xf32>
    %c0_11 = arith.constant 0 : index
    %c0_12 = arith.constant 0 : index
    %12 = vector.load %arg9[%c0_11, %c0_12] : memref<8x128xf32, #tpu.memory_space<vmem>>, vector<8x128xf32>
    %c0_i32_13 = arith.constant 0 : i32
    %c8_i32 = arith.constant 8 : i32
    %13 = arith.muli %c0_i32_13, %c8_i32 : i32
    %14 = tpu.assume_multiple %13, 8 : i32
    %15 = arith.index_cast %14 : i32 to index
    %c0_14 = arith.constant 0 : index
    %16 = vector.load %arg10[%15, %c0_14] : memref<32x128xf32, #tpu.memory_space<vmem>>, vector<8x128xf32>
    %cst_15 = arith.constant dense<0.000000e+00> : vector<8x128xf32>
    %17 = tpu.matmul %12, %11, %cst_15 {dimension_numbers = #tpu.dot_dimension_numbers<[1], [0], [0], [1], [0, 0, 1, 1], [], []>} : vector<8x128xf32>, vector<128x128xf32>, vector<8x128xf32> -> vector<8x128xf32>
    %18 = arith.addf %16, %17 : vector<8x128xf32>
    %19 = math.tanh %18 : vector<8x128xf32>
    %20 = arith.index_cast %14 : i32 to index
    %c0_16 = arith.constant 0 : index
    %21 = vector.load %arg10[%20, %c0_16] : memref<32x128xf32, #tpu.memory_space<vmem>>, vector<8x128xf32>
    tpu.vector_store %arg10[%20, %c0_16], %19 {strides = array<i32>} : memref<32x128xf32, #tpu.memory_space<vmem>>, vector<8x128xf32>,
    %c1_i32 = arith.constant 1 : i32
    %c8_i32_17 = arith.constant 8 : i32
    %22 = arith.muli %c1_i32, %c8_i32_17 : i32
    %23 = tpu.assume_multiple %22, 8 : i32
    %24 = arith.index_cast %23 : i32 to index
    %c0_18 = arith.constant 0 : index
    %25 = vector.load %arg10[%24, %c0_18] : memref<32x128xf32, #tpu.memory_space<vmem>>, vector<8x128xf32>
    %cst_19 = arith.constant dense<0.000000e+00> : vector<8x128xf32>
    %26 = tpu.matmul %19, %11, %cst_19 {dimension_numbers = #tpu.dot_dimension_numbers<[1], [0], [0], [1], [0, 0, 1, 1], [], []>} : vector<8x128xf32>, vector<128x128xf32>, vector<8x128xf32> -> vector<8x128xf32>
    %27 = arith.addf %25, %26 : vector<8x128xf32>
    %28 = math.tanh %27 : vector<8x128xf32>
    %29 = arith.index_cast %23 : i32 to index
    %c0_20 = arith.constant 0 : index
    %30 = vector.load %arg10[%29, %c0_20] : memref<32x128xf32, #tpu.memory_space<vmem>>, vector<8x128xf32>
    tpu.vector_store %arg10[%29, %c0_20], %28 {strides = array<i32>} : memref<32x128xf32, #tpu.memory_space<vmem>>, vector<8x128xf32>,
    %c2_i32 = arith.constant 2 : i32
    %c8_i32_21 = arith.constant 8 : i32
    %31 = arith.muli %c2_i32, %c8_i32_21 : i32
    %32 = tpu.assume_multiple %31, 8 : i32
    %33 = arith.index_cast %32 : i32 to index
    %c0_22 = arith.constant 0 : index
    %34 = vector.load %arg10[%33, %c0_22] : memref<32x128xf32, #tpu.memory_space<vmem>>, vector<8x128xf32>
    %cst_23 = arith.constant dense<0.000000e+00> : vector<8x128xf32>
    %35 = tpu.matmul %28, %11, %cst_23 {dimension_numbers = #tpu.dot_dimension_numbers<[1], [0], [0], [1], [0, 0, 1, 1], [], []>} : vector<8x128xf32>, vector<128x128xf32>, vector<8x128xf32> -> vector<8x128xf32>
    %36 = arith.addf %34, %35 : vector<8x128xf32>
    %37 = math.tanh %36 : vector<8x128xf32>
    %38 = arith.index_cast %32 : i32 to index
    %c0_24 = arith.constant 0 : index
    %39 = vector.load %arg10[%38, %c0_24] : memref<32x128xf32, #tpu.memory_space<vmem>>, vector<8x128xf32>
    tpu.vector_store %arg10[%38, %c0_24], %37 {strides = array<i32>} : memref<32x128xf32, #tpu.memory_space<vmem>>, vector<8x128xf32>,
    %c3_i32 = arith.constant 3 : i32
    %c8_i32_25 = arith.constant 8 : i32
    %40 = arith.muli %c3_i32, %c8_i32_25 : i32
    %41 = tpu.assume_multiple %40, 8 : i32
    %42 = arith.index_cast %41 : i32 to index
    %c0_26 = arith.constant 0 : index
    %43 = vector.load %arg10[%42, %c0_26] : memref<32x128xf32, #tpu.memory_space<vmem>>, vector<8x128xf32>
    %cst_27 = arith.constant dense<0.000000e+00> : vector<8x128xf32>
    %44 = tpu.matmul %37, %11, %cst_27 {dimension_numbers = #tpu.dot_dimension_numbers<[1], [0], [0], [1], [0, 0, 1, 1], [], []>} : vector<8x128xf32>, vector<128x128xf32>, vector<8x128xf32> -> vector<8x128xf32>
    %45 = arith.addf %43, %44 : vector<8x128xf32>
    %46 = math.tanh %45 : vector<8x128xf32>
    %47 = arith.index_cast %41 : i32 to index
    %c0_28 = arith.constant 0 : index
    %48 = vector.load %arg10[%47, %c0_28] : memref<32x128xf32, #tpu.memory_space<vmem>>, vector<8x128xf32>
    tpu.vector_store %arg10[%47, %c0_28], %46 {strides = array<i32>} : memref<32x128xf32, #tpu.memory_space<vmem>>, vector<8x128xf32>,
    %c4_i32 = arith.constant 4 : i32
    %c0_29 = arith.constant 0 : index
    %c0_30 = arith.constant 0 : index
    %49 = vector.load %arg9[%c0_29, %c0_30] : memref<8x128xf32, #tpu.memory_space<vmem>>, vector<8x128xf32>
    tpu.vector_store %arg9[%c0_29, %c0_30], %46 {strides = array<i32>} : memref<8x128xf32, #tpu.memory_space<vmem>>, vector<8x128xf32>,
    %c0_31 = arith.constant 0 : index
    %c0_32 = arith.constant 0 : index
    %50 = vector.load %arg10[%c0_31, %c0_32] : memref<32x128xf32, #tpu.memory_space<vmem>>, vector<32x128xf32>
    %c0_33 = arith.constant 0 : index
    %c0_34 = arith.constant 0 : index
    %51 = vector.load %arg6[%c0_33, %c0_34] : memref<128x8xf32, #tpu.memory_space<vmem>>, vector<128x8xf32>
    %cst_35 = arith.constant dense<0.000000e+00> : vector<32x8xf32>
    %52 = tpu.matmul %50, %51, %cst_35 {dimension_numbers = #tpu.dot_dimension_numbers<[1], [0], [0], [1], [0, 0, 1, 1], [], []>} : vector<32x128xf32>, vector<128x8xf32>, vector<32x8xf32> -> vector<32x8xf32>
    %c0_36 = arith.constant 0 : index
    %c0_37 = arith.constant 0 : index
    %53 = vector.load %arg7[%c0_36, %c0_37] : memref<1x8xf32, #tpu.memory_space<vmem>>, vector<1x8xf32>
    %54 = vector.broadcast %53 : vector<1x8xf32> to vector<32x8xf32>
    %55 = arith.addf %52, %54 : vector<32x8xf32>
    %56 = vector.shape_cast %55 : vector<32x8xf32> to vector<4x8x8xf32>
    %c0_38 = arith.constant 0 : index
    %c0_39 = arith.constant 0 : index
    %c0_40 = arith.constant 0 : index
    %57 = vector.load %arg8[%c0_38, %c0_39, %c0_40] : memref<4x8x8xf32, #tpu.memory_space<vmem>>, vector<4x8x8xf32>
    tpu.vector_store %arg8[%c0_38, %c0_39, %c0_40], %56 {strides = array<i32>} : memref<4x8x8xf32, #tpu.memory_space<vmem>>, vector<4x8x8xf32>,
    return
  }
  func.func @transform_0(%arg0: i32, %arg1: i32) -> (i32, i32, i32) {
    %c0_i32 = arith.constant 0 : i32
    %c0_i32_0 = arith.constant 0 : i32
    return %arg1, %arg0, %c0_i32 : i32, i32, i32
  }
  func.func @transform_1(%arg0: i32, %arg1: i32) -> (i32, i32) {
    %c0_i32 = arith.constant 0 : i32
    %c0_i32_0 = arith.constant 0 : i32
    %c0_i32_1 = arith.constant 0 : i32
    return %c0_i32, %c0_i32_0 : i32, i32
  }
  func.func @transform_2(%arg0: i32, %arg1: i32) -> (i32, i32) {
    %c0_i32 = arith.constant 0 : i32
    %c0_i32_0 = arith.constant 0 : i32
    %c0_i32_1 = arith.constant 0 : i32
    return %c0_i32, %c0_i32_0 : i32, i32
  }
  func.func @transform_3(%arg0: i32, %arg1: i32) -> (i32, i32) {
    %c0_i32 = arith.constant 0 : i32
    %c0_i32_0 = arith.constant 0 : i32
    %c0_i32_1 = arith.constant 0 : i32
    return %c0_i32, %c0_i32_0 : i32, i32
  }
  func.func @transform_4(%arg0: i32, %arg1: i32) -> (i32, i32) {
    %c0_i32 = arith.constant 0 : i32
    %c0_i32_0 = arith.constant 0 : i32
    %c0_i32_1 = arith.constant 0 : i32
    return %c0_i32, %c0_i32_0 : i32, i32
  }
  func.func @transform_5(%arg0: i32, %arg1: i32) -> (i32, i32) {
    %c0_i32 = arith.constant 0 : i32
    %c0_i32_0 = arith.constant 0 : i32
    %c0_i32_1 = arith.constant 0 : i32
    return %c0_i32, %c0_i32_0 : i32, i32
  }
  func.func @transform_6(%arg0: i32, %arg1: i32) -> (i32, i32, i32) {
    %c0_i32 = arith.constant 0 : i32
    %c0_i32_0 = arith.constant 0 : i32
    return %arg1, %arg0, %c0_i32 : i32, i32, i32
  }
}

</mosaic_0001>

<llo_original>
// kernel: tpu_custom_call.1
$region0: #{tpu_custom_call.1}
  #allocation0 [shape = 'u32[]', space=smem, size = 0x4, offset = 0x4, fixed_abs, tag = 'smem constant byte address 0x4 - core index']
  #allocation1 [shape = 'u32[72,128]{1,0:T(1,128)}', space=vmem, size = 0x9000, scoped, tag = 'internal scratch']
  #allocation2 [shape = 'f32[8,128]{1,0:T(8,128)}', space=vmem, size = 0x1000, scoped, tag = 'scratch operand']
  #allocation3 [shape = 'f32[32,128]{1,0:T(8,128)}', space=vmem, size = 0x4000, scoped, tag = 'scratch operand']
  %s0 = inlined_call_operand.hbm [shape: f32[8,8,16], index: 0, kind: input, shape index: {}]
  %s1 = inlined_call_operand.hbm [shape: f32[16,128], index: 1, kind: input, shape index: {}]
  %s2 = inlined_call_operand.vmem [shape: f32[128,128], index: 2, kind: input, shape index: {}]
  %s3 = inlined_call_operand.vmem [shape: f32[1,128], index: 3, kind: input, shape index: {}]
  %s4 = inlined_call_operand.vmem [shape: f32[128,8], index: 4, kind: input, shape index: {}]
  %s5 = inlined_call_operand.vmem [shape: f32[1,8], index: 5, kind: input, shape index: {}]
  %s6 = inlined_call_operand.hbm [shape: f32[8,8,8], index: 6, kind: output, shape index: {}]
  %s7 = sld [smem:[#allocation0]]
  $region69: #{tpu_custom_call.1} parent=0
    _
  %s9 = ssub.s32 1, %s7
  %s10 = scalar_select 0, %s9, %s7
  $region1: #{tpu_custom_call.1} parent=0
    #allocation4 [shape = 'u8[32768]{0}', space=vmem, size = 0x8000, scoped, tag = 'input window, operand 0']
    #allocation5 [shape = 's32[2]{0}', space=sflag, size = 0x8, scoped, tag = 'scoped memory for tpu_custom_call.1']
    #allocation6 [shape = 's32[2]{0}', space=sflag, size = 0x8, scoped, tag = 'scoped memory for tpu_custom_call.1']
    #allocation7 [shape = 'u8[8192]{0}', space=vmem, size = 0x2000, scoped, tag = 'input window, operand 1, single buffered']
    #allocation8 [shape = 's32[1]{0}', space=sflag, size = 0x4, scoped, tag = 'scoped memory for tpu_custom_call.1']
    #allocation9 [shape = 'u8[32768]{0}', space=vmem, size = 0x8000, scoped, tag = 'output window, operand 0']
    %11 = vsyncpa [#allocation5], 0
    %s12 = scalar_lea.sflag [#allocation5], 1
    %13 = vsyncpa %s12, 0
    %14 = vsyncpa [#allocation8], 0
    %15 = vsyncpa [#allocation6], 0
    %s16 = scalar_lea.sflag [#allocation6], 1
    %17 = vsyncpa %s16, 0
    loop: start=0, step=1, limit=4
    $region2: #{tpu_custom_call.1} parent=1 // loop_pre_header
      _
    $region3: #{tpu_custom_call.1} parent=1 // loop_header
      %s19 = sphi 0, %s23
      %p20 = scmp.ge.s32.totalorder %s19, 4
      %s26 = sphi 0, %s38
      %s27 = sphi 0, %s34
      %s28 = sphi 0, %s26
      %s29 = sphi 0, %s27
      %s30 = sphi 0, %s28
      %s31 = sphi 0, %s29
      %s43 = sphi 0, %s45
      %s46 = sphi 0, %s43
      %s47 = sphi 0, %s46
      %s63 = sphi 0, %s47
      %s67 = sphi 0, %s67
      %s69 = sphi 0, %s67
      %s70 = sphi 0, %s69
      %s84 = sphi 0, %s70
      %s88 = sphi 0, %s88
      %s90 = sphi 0, %s88
      %s91 = sphi 0, %s90
      %s105 = sphi 0, %s91
      %s109 = sphi 0, %s109
      %s111 = sphi 0, %s109
      %s112 = sphi 0, %s111
      %s126 = sphi 0, %s112
      %s130 = sphi 0, %s130
      %s132 = sphi 0, %s130
      %s133 = sphi 0, %s132
      %s147 = sphi 0, %s133
      %s151 = sphi 0, %s151
      %s153 = sphi 0, %s151
      %s154 = sphi 0, %s153
      %s168 = sphi 0, %s154
      %s176 = sphi 0, %s178
      %s179 = sphi 0, %s176
      %s180 = sphi 0, %s179
      %s196 = sphi 0, %s180
    $region4: #{tpu_custom_call.1} parent=1 // loop_header_branch
      %22 = sbr.rel (%p20) target = $region8
    $region5: #{tpu_custom_call.1} parent=1 // loop_body
      %s24 = ssub.s32 %s19, 1
      %s25 = ssub.s32 %s19, 2
      %s32 = sadd.s32 1, %s27
      %p33 = scmp.ge.s32.totalorder %s32, 2
      %s34 = scalar_select %p33, 0, %s32
      %s35 = sadd.s32 1, %s26
      %s36 = scalar_select %p33, %s35, %s26
      %p37 = scmp.ge.s32.totalorder %s36, 1
      %s38 = scalar_select %p37, 0, %s36
      %s39 = ssub.s32 %s27, %s34
      %s40 = ssub.s32 %s26, %s38
      %s41 = sor.u32 %s39, %s40
      %p42 = scmp.eq.s32.totalorder %s41, 0
      %s44 = sadd.s32 %s43, 1
      %s45 = scalar_select %p42, %s43, %s44
      %p48 = pneg %p42
      %p49 = scmp.eq.s32.totalorder %s19, 1
      %p50 = por %p48, %p49
      %p51 = scmp.ne.s32.totalorder %s43, %s46
      %p52 = scmp.eq.s32.totalorder %s19, 0
      %p53 = por %p51, %p52
      %p54 = scmp.ne.s32.totalorder %s43, %s46
      %p55 = scmp.eq.s32.totalorder %s24, 1
      %p56 = por %p54, %p55
      %p57 = scmp.ne.s32.totalorder %s46, %s47
      %p58 = scmp.eq.s32.totalorder %s24, 0
      %p59 = por %p57, %p58
      %p60 = scmp.ne.s32.totalorder %s46, %s47
      %p61 = scmp.eq.s32.totalorder %s25, 1
      %p62 = por %p60, %p61
      %p64 = scmp.ne.s32.totalorder %s47, %s63
      %p65 = scmp.eq.s32.totalorder %s25, 0
      %p66 = por %p64, %p65
      %s68 = sadd.s32 %s67, 1
      %p71 = scmp.eq.s32.totalorder %s19, 1
      %p72 = scmp.ne.s32.totalorder %s67, %s69
      %p73 = scmp.eq.s32.totalorder %s19, 0
      %p74 = por %p72, %p73
      %p75 = scmp.ne.s32.totalorder %s67, %s69
      %p76 = scmp.eq.s32.totalorder %s24, 1
      %p77 = por %p75, %p76
      %p78 = scmp.ne.s32.totalorder %s69, %s70
      %p79 = scmp.eq.s32.totalorder %s24, 0
      %p80 = por %p78, %p79
      %p81 = scmp.ne.s32.totalorder %s69, %s70
      %p82 = scmp.eq.s32.totalorder %s25, 1
      %p83 = por %p81, %p82
      %p85 = scmp.ne.s32.totalorder %s70, %s84
      %p86 = scmp.eq.s32.totalorder %s25, 0
      %p87 = por %p85, %p86
      %s89 = sadd.s32 %s88, 1
      %p92 = scmp.eq.s32.totalorder %s19, 1
      %p93 = scmp.ne.s32.totalorder %s88, %s90
      %p94 = scmp.eq.s32.totalorder %s19, 0
      %p95 = por %p93, %p94
      %p96 = scmp.ne.s32.totalorder %s88, %s90
      %p97 = scmp.eq.s32.totalorder %s24, 1
      %p98 = por %p96, %p97
      %p99 = scmp.ne.s32.totalorder %s90, %s91
      %p100 = scmp.eq.s32.totalorder %s24, 0
      %p101 = por %p99, %p100
      %p102 = scmp.ne.s32.totalorder %s90, %s91
      %p103 = scmp.eq.s32.totalorder %s25, 1
      %p104 = por %p102, %p103
      %p106 = scmp.ne.s32.totalorder %s91, %s105
      %p107 = scmp.eq.s32.totalorder %s25, 0
      %p108 = por %p106, %p107
      %s110 = sadd.s32 %s109, 1
      %p113 = scmp.eq.s32.totalorder %s19, 1
      %p114 = scmp.ne.s32.totalorder %s109, %s111
      %p115 = scmp.eq.s32.totalorder %s19, 0
      %p116 = por %p114, %p115
      %p117 = scmp.ne.s32.totalorder %s109, %s111
      %p118 = scmp.eq.s32.totalorder %s24, 1
      %p119 = por %p117, %p118
      %p120 = scmp.ne.s32.totalorder %s111, %s112
      %p121 = scmp.eq.s32.totalorder %s24, 0
      %p122 = por %p120, %p121
      %p123 = scmp.ne.s32.totalorder %s111, %s112
      %p124 = scmp.eq.s32.totalorder %s25, 1
      %p125 = por %p123, %p124
      %p127 = scmp.ne.s32.totalorder %s112, %s126
      %p128 = scmp.eq.s32.totalorder %s25, 0
      %p129 = por %p127, %p128
      %s131 = sadd.s32 %s130, 1
      %p134 = scmp.eq.s32.totalorder %s19, 1
      %p135 = scmp.ne.s32.totalorder %s130, %s132
      %p136 = scmp.eq.s32.totalorder %s19, 0
      %p137 = por %p135, %p136
      %p138 = scmp.ne.s32.totalorder %s130, %s132
      %p139 = scmp.eq.s32.totalorder %s24, 1
      %p140 = por %p138, %p139
      %p141 = scmp.ne.s32.totalorder %s132, %s133
      %p142 = scmp.eq.s32.totalorder %s24, 0
      %p143 = por %p141, %p142
      %p144 = scmp.ne.s32.totalorder %s132, %s133
      %p145 = scmp.eq.s32.totalorder %s25, 1
      %p146 = por %p144, %p145
      %p148 = scmp.ne.s32.totalorder %s133, %s147
      %p149 = scmp.eq.s32.totalorder %s25, 0
      %p150 = por %p148, %p149
      %s152 = sadd.s32 %s151, 1
      %p155 = scmp.eq.s32.totalorder %s19, 1
      %p156 = scmp.ne.s32.totalorder %s151, %s153
      %p157 = scmp.eq.s32.totalorder %s19, 0
      %p158 = por %p156, %p157
      %p159 = scmp.ne.s32.totalorder %s151, %s153
      %p160 = scmp.eq.s32.totalorder %s24, 1
      %p161 = por %p159, %p160
      %p162 = scmp.ne.s32.totalorder %s153, %s154
      %p163 = scmp.eq.s32.totalorder %s24, 0
      %p164 = por %p162, %p163
      %p165 = scmp.ne.s32.totalorder %s153, %s154
      %p166 = scmp.eq.s32.totalorder %s25, 1
      %p167 = por %p165, %p166
      %p169 = scmp.ne.s32.totalorder %s154, %s168
      %p170 = scmp.eq.s32.totalorder %s25, 0
      %p171 = por %p169, %p170
      %s172 = ssub.s32 %s27, %s34
      %s173 = ssub.s32 %s26, %s38
      %s174 = sor.u32 %s172, %s173
      %p175 = scmp.eq.s32.totalorder %s174, 0
      %s177 = sadd.s32 %s176, 1
      %s178 = scalar_select %p175, %s176, %s177
      %p181 = pneg %p175
      %p182 = scmp.eq.s32.totalorder %s19, 1
      %p183 = por %p181, %p182
      %p184 = scmp.ne.s32.totalorder %s176, %s179
      %p185 = scmp.eq.s32.totalorder %s19, 0
      %p186 = por %p184, %p185
      %p187 = scmp.ne.s32.totalorder %s176, %s179
      %p188 = scmp.eq.s32.totalorder %s24, 1
      %p189 = por %p187, %p188
      %p190 = scmp.ne.s32.totalorder %s179, %s180
      %p191 = scmp.eq.s32.totalorder %s24, 0
      %p192 = por %p190, %p191
      %p193 = scmp.ne.s32.totalorder %s179, %s180
      %p194 = scmp.eq.s32.totalorder %s25, 1
      %p195 = por %p193, %p194
      %p197 = scmp.ne.s32.totalorder %s180, %s196
      %p198 = scmp.eq.s32.totalorder %s25, 0
      %p199 = por %p197, %p198
      %p200 = scmp.le.s32.totalorder 1, %s19
      %p201 = scmp.lt.s32.totalorder %s19, 3
      %p202 = pnand %p200, %p201
      %p203 = pneg %p202
      // Predicated region
      $region9: #{tpu_custom_call.1} parent=5 // pred_check
        _
      $region10: #{tpu_custom_call.1} parent=5 // pred_check_branch
        %205 = sbr.rel (%p202) target = $region12
      $region11: #{tpu_custom_call.1} parent=5 // pred_region
        %s206 = ssub.s32 %s19, 1
        // Predicated region
        $region13: #{tpu_custom_call.1} parent=11 // pred_check
          %p207 = pneg %p80
        $region14: #{tpu_custom_call.1} parent=11 // pred_check_branch
          %209 = sbr.rel (%p207) target = $region16
        $region15: #{tpu_custom_call.1} parent=11 // pred_region
          %211 = vsyncadd [#allocation8], 0
          %s212 = sshll.u32 %s1, 4
          %s213 = int_to_ptr.hbm [resolvable:$true] %s212
          %s214 = sshll.u32 [#allocation7], 4
          %s215 = int_to_ptr.vmem [resolvable:$true] %s214
          %220 = dma.hbm_to_vmem [thread:$0]  %s213, 256, %s215, [#allocation8], 128, 128, 8
        $region16: #{tpu_custom_call.1} parent=11 // pred_fallthru
          _
        // Predicated region
        $region17: #{tpu_custom_call.1} parent=11 // pred_check
          %p221 = pneg %p101
        $region18: #{tpu_custom_call.1} parent=11 // pred_check_branch
          %223 = sbr.rel (%p221) target = $region20
        $region19: #{tpu_custom_call.1} parent=11 // pred_region
          _
        $region20: #{tpu_custom_call.1} parent=11 // pred_fallthru
          _
        // Predicated region
        $region21: #{tpu_custom_call.1} parent=11 // pred_check
          %p224 = pneg %p122
        $region22: #{tpu_custom_call.1} parent=11 // pred_check_branch
          %226 = sbr.rel (%p224) target = $region24
        $region23: #{tpu_custom_call.1} parent=11 // pred_region
          _
        $region24: #{tpu_custom_call.1} parent=11 // pred_fallthru
          _
        // Predicated region
        $region25: #{tpu_custom_call.1} parent=11 // pred_check
          %p227 = pneg %p143
        $region26: #{tpu_custom_call.1} parent=11 // pred_check_branch
          %229 = sbr.rel (%p227) target = $region28
        $region27: #{tpu_custom_call.1} parent=11 // pred_region
          _
        $region28: #{tpu_custom_call.1} parent=11 // pred_fallthru
          _
        // Predicated region
        $region29: #{tpu_custom_call.1} parent=11 // pred_check
          %p230 = pneg %p164
        $region30: #{tpu_custom_call.1} parent=11 // pred_check_branch
          %232 = sbr.rel (%p230) target = $region32
        $region31: #{tpu_custom_call.1} parent=11 // pred_region
          _
        $region32: #{tpu_custom_call.1} parent=11 // pred_fallthru
          _
      $region12: #{tpu_custom_call.1} parent=5 // pred_fallthru
        _
      %p233 = scmp.lt.s32.totalorder %s19, 2
      // Predicated region
      $region33: #{tpu_custom_call.1} parent=5 // pred_check
        %p234 = pneg %p233
      $region34: #{tpu_custom_call.1} parent=5 // pred_check_branch
        %236 = sbr.rel (%p234) target = $region36
      $region35: #{tpu_custom_call.1} parent=5 // pred_region
        // Predicated region
        $region37: #{tpu_custom_call.1} parent=35 // pred_check
          %p237 = pneg %p53
        $region38: #{tpu_custom_call.1} parent=35 // pred_check_branch
          %239 = sbr.rel (%p237) target = $region40
        $region39: #{tpu_custom_call.1} parent=35 // pred_region
          %s240 = sand.u32 %s43, 1
          %s241 = scalar_lea.sflag [#allocation5], %s240
          %s242 = sand.u32 %s43, 1
          %s243 = smul.addr %s242, 32
          %s244 = scalar_lea.vmem [#allocation4], %s243
          %s245 = smul.u32 4, %s27
          %247 = vsyncadd %s241, 0
          %s248 = sadd.s32 %s26, %s245
          %s249 = smul.addr %s248, 8
          %s250 = scalar_lea.hbm %s0, %s249
          %s251 = sshll.u32 %s250, 4
          %s252 = int_to_ptr.hbm [resolvable:$true] %s251
          %s253 = sshll.u32 %s244, 4
          %s254 = int_to_ptr.vmem [resolvable:$true] %s253
          %259 = dma.hbm_to_vmem [thread:$0]  %s252, 512, %s254, %s241, 128, 128, 8
        $region40: #{tpu_custom_call.1} parent=35 // pred_fallthru
          _
      $region36: #{tpu_custom_call.1} parent=5 // pred_fallthru
        _
      %p260 = scmp.le.s32.totalorder 1, %s19
      %p261 = scmp.lt.s32.totalorder %s19, 3
      %p262 = pnand %p260, %p261
      %p263 = pneg %p262
      // Predicated region
      $region41: #{tpu_custom_call.1} parent=5 // pred_check
        _
      $region42: #{tpu_custom_call.1} parent=5 // pred_check_branch
        %265 = sbr.rel (%p262) target = $region44
      $region43: #{tpu_custom_call.1} parent=5 // pred_region
        %s266 = ssub.s32 %s19, 1
        %s267 = sand.u32 %s46, 1
        %s268 = scalar_lea.sflag [#allocation5], %s267
        %s269 = sand.u32 %s46, 1
        %s270 = smul.addr %s269, 32
        %s271 = scalar_lea.vmem [#allocation4], %s270
        // Predicated region
        $region45: #{tpu_custom_call.1} parent=43 // pred_check
          %p272 = pneg %p59
        $region46: #{tpu_custom_call.1} parent=43 // pred_check_branch
          %274 = sbr.rel (%p272) target = $region48
        $region47: #{tpu_custom_call.1} parent=43 // pred_region
          %276 = dma.done %s268, 512
        $region48: #{tpu_custom_call.1} parent=43 // pred_fallthru
          _
        // Predicated region
        $region49: #{tpu_custom_call.1} parent=43 // pred_check
          %p277 = pneg %p80
        $region50: #{tpu_custom_call.1} parent=43 // pred_check_branch
          %279 = sbr.rel (%p277) target = $region52
        $region51: #{tpu_custom_call.1} parent=43 // pred_region
          %281 = dma.done [#allocation8], 256
        $region52: #{tpu_custom_call.1} parent=43 // pred_fallthru
          _
        %s282 = sand.u32 %s46, 1
        %s283 = scalar_lea.sflag [#allocation5], %s282
        %s284 = sand.u32 %s46, 1
        %s285 = smul.addr %s284, 32
        %s286 = scalar_lea.vmem [#allocation4], %s285
        %p287 = pneg %p59
        %p288 = pneg %p56
        %p289 = pneg %p80
        %p290 = pneg %p77
        %p291 = pneg %p101
        %p292 = pneg %p98
        %p293 = pneg %p122
        %p294 = pneg %p119
        %p295 = pneg %p143
        %p296 = pneg %p140
        %p297 = pneg %p164
        %p298 = pneg %p161
        %p299 = pneg %p192
        %p300 = pneg %p189
        %s301 = sand.u32 %s179, 1
        %s302 = scalar_lea.sflag [#allocation6], %s301
        %s303 = sand.u32 %s179, 1
        %s304 = smul.addr %s303, 32
        %s305 = scalar_lea.vmem [#allocation9], %s304
        %s306 = smul.u32 4, %s29
        %s307 = smul.u32 4, %s29
        %p308 = scmp.eq.s32.totalorder %s29, 0
        // Predicated region
        $region53: #{tpu_custom_call.1} parent=43 // pred_check
          %p309 = pneg %p308
        $region54: #{tpu_custom_call.1} parent=43 // pred_check_branch
          %311 = sbr.rel (%p309) target = $region56
        $region55: #{tpu_custom_call.1} parent=43 // pred_region
          %312 = vst [vmem:[#allocation2] sm:$0xff] 0.0
        $region56: #{tpu_custom_call.1} parent=43 // pred_fallthru
          _
        %v313 = vld [vmem:[%s271] sm:$0xff]
        %v314 = vld [vmem:[%s271 + $0x8] sm:$0xff]
        %v315 = vld [vmem:[%s271 + $0x10] sm:$0xff]
        %v316 = vld [vmem:[%s271 + $0x18] sm:$0xff]
        %v317 = vld [vmem:[#allocation7] sm:$0xff]
        %v318 = vld [vmem:[#allocation7 + $0x8] sm:$0xff]
        %v319 = vld [vmem:[%s3] sm:$0x1]
        %v321 = vperm.slane %v319, 0
        %vm323 = vcmask 130048
        %v325 = vsel %vm323, %v313, 0
        %v328 = vsel %vm323, %v314, 0
        %v331 = vsel %vm323, %v315, 0
        %v334 = vsel %vm323, %v316, 0
        %336 = vmatpush.msra.mxu0 0.0
        %337 = vmatpush.msra.mxu0 0.0
        %338 = vmatpush.msra.mxu0 0.0
        %339 = vmatpush.msra.mxu0 0.0
        %340 = vmatpush.msra.mxu0 0.0
        %341 = vmatpush.msra.mxu0 0.0
        %342 = vmatpush.msra.mxu0 0.0
        %343 = vmatpush.msra.mxu0 0.0
        %344 = vmatpush.msra.mxu0 0.0
        %345 = vmatpush.msra.mxu0 0.0
        %346 = vmatpush.msra.mxu0 0.0
        %347 = vmatpush.msra.mxu0 0.0
        %348 = vmatpush.msra.mxu0 0.0
        %349 = vmatpush.msra.mxu0 0.0
        %350 = vmatpush.msra.mxu0 %v318
        %351 = vmatpush.msra.mxu0 %v317
        %352 = vmatmul.f32.gmra.mxu0 %v325
        %v353 = vpop.f32.mrf.mxu0
        %v354 = vadd.f32 %v321, %v353
        %355 = vmatmul.f32.gmra.mxu0 %v328
        %v356 = vpop.f32.mrf.mxu0
        %v357 = vadd.f32 %v321, %v356
        %358 = vmatmul.f32.gmra.mxu0 %v331
        %v359 = vpop.f32.mrf.mxu0
        %v360 = vadd.f32 %v321, %v359
        %361 = vmatmul.f32.gmra.mxu0 %v334
        %v362 = vpop.f32.mrf.mxu0
        %v363 = vadd.f32 %v321, %v362
        %364 = vdwg.mxu0
        %365 = vst [vmem:[#allocation3] sm:$0xff] %v354
        %366 = vst [vmem:[#allocation3 + $0x8] sm:$0xff] %v357
        %367 = vst [vmem:[#allocation3 + $0x10] sm:$0xff] %v360
        %368 = vst [vmem:[#allocation3 + $0x18] sm:$0xff] %v363
        %v369 = vld [vmem:[%s2] sm:$0xff]
        %v370 = vld [vmem:[%s2 + $0x8] sm:$0xff]
        %v371 = vld [vmem:[%s2 + $0x10] sm:$0xff]
        %v372 = vld [vmem:[%s2 + $0x18] sm:$0xff]
        %v373 = vld [vmem:[%s2 + $0x20] sm:$0xff]
        %v374 = vld [vmem:[%s2 + $0x28] sm:$0xff]
        %v375 = vld [vmem:[%s2 + $0x30] sm:$0xff]
        %v376 = vld [vmem:[%s2 + $0x38] sm:$0xff]
        %v377 = vld [vmem:[%s2 + $0x40] sm:$0xff]
        %v378 = vld [vmem:[%s2 + $0x48] sm:$0xff]
        %v379 = vld [vmem:[%s2 + $0x50] sm:$0xff]
        %v380 = vld [vmem:[%s2 + $0x58] sm:$0xff]
        %v381 = vld [vmem:[%s2 + $0x60] sm:$0xff]
        %v382 = vld [vmem:[%s2 + $0x68] sm:$0xff]
        %v383 = vld [vmem:[%s2 + $0x70] sm:$0xff]
        %v384 = vld [vmem:[%s2 + $0x78] sm:$0xff]
        %v385 = vld [vmem:[#allocation2] sm:$0xff]
        %v386 = vld [vmem:[#allocation3] sm:$0xff]
        %387 = vmatpush.msra.mxu0 %v384
        %388 = vmatpush.msra.mxu0 %v383
        %389 = vmatpush.msra.mxu0 %v382
        %390 = vmatpush.msra.mxu0 %v381
        %391 = vmatpush.msra.mxu0 %v380
        %392 = vmatpush.msra.mxu0 %v379
        %393 = vmatpush.msra.mxu0 %v378
        %394 = vmatpush.msra.mxu0 %v377
        %395 = vmatpush.msra.mxu0 %v376
        %396 = vmatpush.msra.mxu0 %v375
        %397 = vmatpush.msra.mxu0 %v374
        %398 = vmatpush.msra.mxu0 %v373
        %399 = vmatpush.msra.mxu0 %v372
        %400 = vmatpush.msra.mxu0 %v371
        %401 = vmatpush.msra.mxu0 %v370
        %402 = vmatpush.msra.mxu0 %v369
        %403 = vmatmul.f32.gmra.mxu0 %v385
        %v404 = vpop.f32.mrf.mxu0
        %v405 = vadd.f32 0.0, %v404
        %406 = vdwg.mxu0
        %v407 = vadd.f32 %v386, %v405
        %v408 = vtanh.pop %v407
        %409 = vst [vmem:[#allocation3] sm:$0xff] %v408
        %s410 = scalar_lea.vmem [#allocation3], 8
        %v411 = vld [vmem:[%s410] sm:$0xff]
        %412 = vmatpush.msra.mxu0 %v384
        %413 = vmatpush.msra.mxu0 %v383
        %414 = vmatpush.msra.mxu0 %v382
        %415 = vmatpush.msra.mxu0 %v381
        %416 = vmatpush.msra.mxu0 %v380
        %417 = vmatpush.msra.mxu0 %v379
        %418 = vmatpush.msra.mxu0 %v378
        %419 = vmatpush.msra.mxu0 %v377
        %420 = vmatpush.msra.mxu0 %v376
        %421 = vmatpush.msra.mxu0 %v375
        %422 = vmatpush.msra.mxu0 %v374
        %423 = vmatpush.msra.mxu0 %v373
        %424 = vmatpush.msra.mxu0 %v372
        %425 = vmatpush.msra.mxu0 %v371
        %426 = vmatpush.msra.mxu0 %v370
        %427 = vmatpush.msra.mxu0 %v369
        %428 = vmatmul.f32.gmra.mxu0 %v408
        %v429 = vpop.f32.mrf.mxu0
        %v430 = vadd.f32 0.0, %v429
        %431 = vdwg.mxu0
        %v432 = vadd.f32 %v411, %v430
        %v433 = vtanh.pop %v432
        %434 = vst [vmem:[%s410] sm:$0xff] %v433
        %s435 = scalar_lea.vmem [#allocation3], 16
        %v436 = vld [vmem:[%s435] sm:$0xff]
        %437 = vmatpush.msra.mxu0 %v384
        %438 = vmatpush.msra.mxu0 %v383
        %439 = vmatpush.msra.mxu0 %v382
        %440 = vmatpush.msra.mxu0 %v381
        %441 = vmatpush.msra.mxu0 %v380
        %442 = vmatpush.msra.mxu0 %v379
        %443 = vmatpush.msra.mxu0 %v378
        %444 = vmatpush.msra.mxu0 %v377
        %445 = vmatpush.msra.mxu0 %v376
        %446 = vmatpush.msra.mxu0 %v375
        %447 = vmatpush.msra.mxu0 %v374
        %448 = vmatpush.msra.mxu0 %v373
        %449 = vmatpush.msra.mxu0 %v372
        %450 = vmatpush.msra.mxu0 %v371
        %451 = vmatpush.msra.mxu0 %v370
        %452 = vmatpush.msra.mxu0 %v369
        %453 = vmatmul.f32.gmra.mxu0 %v433
        %v454 = vpop.f32.mrf.mxu0
        %v455 = vadd.f32 0.0, %v454
        %456 = vdwg.mxu0
        %v457 = vadd.f32 %v436, %v455
        %v458 = vtanh.pop %v457
        %459 = vst [vmem:[%s435] sm:$0xff] %v458
        %s460 = scalar_lea.vmem [#allocation3], 24
        %v461 = vld [vmem:[%s460] sm:$0xff]
        %462 = vmatpush.msra.mxu0 %v384
        %463 = vmatpush.msra.mxu0 %v383
        %464 = vmatpush.msra.mxu0 %v382
        %465 = vmatpush.msra.mxu0 %v381
        %466 = vmatpush.msra.mxu0 %v380
        %467 = vmatpush.msra.mxu0 %v379
        %468 = vmatpush.msra.mxu0 %v378
        %469 = vmatpush.msra.mxu0 %v377
        %470 = vmatpush.msra.mxu0 %v376
        %471 = vmatpush.msra.mxu0 %v375
        %472 = vmatpush.msra.mxu0 %v374
        %473 = vmatpush.msra.mxu0 %v373
        %474 = vmatpush.msra.mxu0 %v372
        %475 = vmatpush.msra.mxu0 %v371
        %476 = vmatpush.msra.mxu0 %v370
        %477 = vmatpush.msra.mxu0 %v369
        %478 = vmatmul.f32.gmra.mxu0 %v458
        %v479 = vpop.f32.mrf.mxu0
        %v480 = vadd.f32 0.0, %v479
        %481 = vdwg.mxu0
        %v482 = vadd.f32 %v461, %v480
        %v483 = vtanh.pop %v482
        %484 = vst [vmem:[%s460] sm:$0xff] %v483
        %485 = vst [vmem:[#allocation2] sm:$0xff] %v483
        %v486 = vld [vmem:[#allocation3] sm:$0xff]
        %v487 = vld [vmem:[#allocation3 + $0x8] sm:$0xff]
        %v488 = vld [vmem:[#allocation3 + $0x10] sm:$0xff]
        %v489 = vld [vmem:[#allocation3 + $0x18] sm:$0xff]
        %v490 = vld [vmem:[%s4] sm:$0xff]
        %v491 = vld [vmem:[%s4 + $0x8] sm:$0xff]
        %v492 = vld [vmem:[%s4 + $0x10] sm:$0xff]
        %v493 = vld [vmem:[%s4 + $0x18] sm:$0xff]
        %v494 = vld [vmem:[%s4 + $0x20] sm:$0xff]
        %v495 = vld [vmem:[%s4 + $0x28] sm:$0xff]
        %v496 = vld [vmem:[%s4 + $0x30] sm:$0xff]
        %v497 = vld [vmem:[%s4 + $0x38] sm:$0xff]
        %v498 = vld [vmem:[%s4 + $0x40] sm:$0xff]
        %v499 = vld [vmem:[%s4 + $0x48] sm:$0xff]
        %v500 = vld [vmem:[%s4 + $0x50] sm:$0xff]
        %v501 = vld [vmem:[%s4 + $0x58] sm:$0xff]
        %v502 = vld [vmem:[%s4 + $0x60] sm:$0xff]
        %v503 = vld [vmem:[%s4 + $0x68] sm:$0xff]
        %v504 = vld [vmem:[%s4 + $0x70] sm:$0xff]
        %v505 = vld [vmem:[%s4 + $0x78] sm:$0xff]
        %v506 = vld [vmem:[%s5] sm:$0x1]
        %v508 = vperm.slane %v506, 0
        %510 = vmatpush.msra.mxu0 %v505
        %511 = vmatpush.msra.mxu0 %v504
        %512 = vmatpush.msra.mxu0 %v503
        %513 = vmatpush.msra.mxu0 %v502
        %514 = vmatpush.msra.mxu0 %v501
        %515 = vmatpush.msra.mxu0 %v500
        %516 = vmatpush.msra.mxu0 %v499
        %517 = vmatpush.msra.mxu0 %v498
        %518 = vmatpush.msra.mxu0 %v497
        %519 = vmatpush.msra.mxu0 %v496
        %520 = vmatpush.msra.mxu0 %v495
        %521 = vmatpush.msra.mxu0 %v494
        %522 = vmatpush.msra.mxu0 %v493
        %523 = vmatpush.msra.mxu0 %v492
        %524 = vmatpush.msra.mxu0 %v491
        %525 = vmatpush.msra.mxu0 %v490
        %526 = vmatmul.f32.gmra.mxu0 %v486
        %v527 = vpop.f32.mrf.mxu0
        %v528 = vadd.f32 %v508, %v527
        %529 = vmatmul.f32.gmra.mxu0 %v487
        %v530 = vpop.f32.mrf.mxu0
        %v531 = vadd.f32 %v508, %v530
        %532 = vmatmul.f32.gmra.mxu0 %v488
        %v533 = vpop.f32.mrf.mxu0
        %v534 = vadd.f32 %v508, %v533
        %535 = vmatmul.f32.gmra.mxu0 %v489
        %v536 = vpop.f32.mrf.mxu0
        %v537 = vadd.f32 %v508, %v536
        %538 = vdwg.mxu0
        %vm539 = vcmask 64512
        %540 = vst.msk [vmem:[%s305] sm:$0xff] %vm539, %v528
        %541 = vst.msk [vmem:[%s305 + $0x8] sm:$0xff] %vm539, %v531
        %542 = vst.msk [vmem:[%s305 + $0x10] sm:$0xff] %vm539, %v534
        %543 = vst.msk [vmem:[%s305 + $0x18] sm:$0xff] %vm539, %v537
        %s544 = sand.u32 %s179, 1
        %s545 = scalar_lea.sflag [#allocation6], %s544
        %s546 = sand.u32 %s179, 1
        %s547 = smul.addr %s546, 32
        %s548 = scalar_lea.vmem [#allocation9], %s547
        // Predicated region
        $region57: #{tpu_custom_call.1} parent=43 // pred_check
          %p549 = pneg %p189
        $region58: #{tpu_custom_call.1} parent=43 // pred_check_branch
          %551 = sbr.rel (%p549) target = $region60
        $region59: #{tpu_custom_call.1} parent=43 // pred_region
          %s552 = smul.u32 4, %s29
          %554 = vsyncadd %s545, 0
          %s555 = sadd.s32 %s28, %s552
          %s556 = smul.addr %s555, 8
          %s557 = scalar_lea.hbm %s6, %s556
          %s558 = sshll.u32 %s548, 4
          %s559 = int_to_ptr.vmem [resolvable:$true] %s558
          %s560 = sshll.u32 %s557, 4
          %s561 = int_to_ptr.hbm [resolvable:$true] %s560
          %566 = dma.vmem_to_hbm [thread:$0]  %s559, 512, %s561, %s545, 128, 128, 8
        $region60: #{tpu_custom_call.1} parent=43 // pred_fallthru
          _
      $region44: #{tpu_custom_call.1} parent=5 // pred_fallthru
        _
      %p567 = scmp.le.s32.totalorder 2, %s19
      // Predicated region
      $region61: #{tpu_custom_call.1} parent=5 // pred_check
        %p568 = pneg %p567
      $region62: #{tpu_custom_call.1} parent=5 // pred_check_branch
        %570 = sbr.rel (%p568) target = $region64
      $region63: #{tpu_custom_call.1} parent=5 // pred_region
        %s571 = ssub.s32 %s19, 2
        // Predicated region
        $region65: #{tpu_custom_call.1} parent=63 // pred_check
          %p572 = pneg %p195
        $region66: #{tpu_custom_call.1} parent=63 // pred_check_branch
          %574 = sbr.rel (%p572) target = $region68
        $region67: #{tpu_custom_call.1} parent=63 // pred_region
          %s575 = sand.u32 %s180, 1
          %s576 = scalar_lea.sflag [#allocation6], %s575
          %s577 = sand.u32 %s180, 1
          %s578 = smul.addr %s577, 32
          %s579 = scalar_lea.vmem [#allocation9], %s578
          %581 = dma.done %s576, 512
        $region68: #{tpu_custom_call.1} parent=63 // pred_fallthru
          _
      $region64: #{tpu_custom_call.1} parent=5 // pred_fallthru
        _
    $region6: #{tpu_custom_call.1} parent=1 // loop_footer
      %s23 = sadd.s32 1, %s19
    $region7: #{tpu_custom_call.1} parent=1 // loop_footer_branch
      %18 = sbr.rel target = $region3
    $region8: #{tpu_custom_call.1} parent=1 // loop_exit
      _
    %582 = vsyncpa [#allocation5], 1
    %s583 = scalar_lea.sflag [#allocation5], 1
    %584 = vsyncpa %s583, 1
    %585 = vsyncpa [#allocation8], 1
    %586 = vsyncpa [#allocation6], 1
    %s587 = scalar_lea.sflag [#allocation6], 1
    %588 = vsyncpa %s587, 1

</llo_original>
